<compile_context>
chip_gen: v5e
topology: v5e:2x2
jax: 0.10.0
libtpu: 0.0.40
codegen_flags: <defaults>
</compile_context>

<pallas_src>
import jax
import jax.numpy as jnp
from jax.experimental import pallas as pl
from jax.experimental.pallas import tpu as pltpu


def _head_kernel(x_ref, w_ref, out_ref):
    Bb, T, C = x_ref.shape
    hs = out_ref.shape[-1]

    # bf16 MXU operands; x arrives f32 (producer-side bf16 only helps if the
    # upstream op can fuse the cast -- a standalone wrapper cast would add an
    # HBM round trip, so the cast stays in-kernel).
    x = x_ref[...].reshape(Bb * T, C).astype(jnp.bfloat16)      # (Bb*T, C)
    w = w_ref[...]                                              # (C, 3*hs) bf16

    # Fused Q/K/V projection: ONE MXU matmul, f32 accumulation.
    qkv = jnp.dot(x, w, preferred_element_type=jnp.float32)     # (Bb*T, 3*hs)
    qkv = qkv.reshape(Bb, T, 3 * hs)

    q = qkv[..., 0 * hs:1 * hs]                                 # (Bb, T, hs)
    k = qkv[..., 1 * hs:2 * hs]
    v = qkv[..., 2 * hs:3 * hs]

    # scores = q @ k^T * hs**-0.5 over the whole batch (no k.T materialized).
    scale = hs ** (-0.5)
    scores = jnp.einsum(
        'bqd,bkd->bqk',
        q.astype(jnp.bfloat16), k.astype(jnp.bfloat16),
        preferred_element_type=jnp.float32) * scale             # (Bb, T, T)

    # Causal (tril) mask.
    row = jax.lax.broadcasted_iota(jnp.int32, (T, T), 0)
    col = jax.lax.broadcasted_iota(jnp.int32, (T, T), 1)
    scores = jnp.where((col <= row)[None, :, :], scores, -jnp.inf)

    # Numerically-stable softmax in f32; reciprocal on the EUP (approx=True).
    scores = scores - jnp.max(scores, axis=-1, keepdims=True)
    p = jnp.exp(scores)
    p = p * pl.reciprocal(jnp.sum(p, axis=-1, keepdims=True), approx=True)

    # TODO(synk): dropout on the attention weights omitted (eval/inference mode).
    out = jnp.einsum(
        'bqk,bkd->bqd',
        p.astype(jnp.bfloat16), v.astype(jnp.bfloat16),
        preferred_element_type=jnp.float32)                     # (Bb, T, hs)
    out_ref[...] = out.astype(out_ref.dtype)


def prepare_head_weights(wq, wk, wv):
    """One-time (parameter-load time) weight prep for the Pallas kernel.

    wq, wk, wv : (head_size, C) float32  (nn.Linear(n_embed, head_size).weight)
    returns    : (C, 3*head_size) bfloat16 fused projection matrix.
    Hoisted out of the per-call path so the transpose/concat/cast is not
    re-executed every forward.
    """
    return jnp.concatenate([wq.T, wk.T, wv.T], axis=1).astype(jnp.bfloat16)


def head_attention(x, w_qkv, head_size, *, batch_blocks=1):
    """Pallas forward pass of `Head` (eval mode).

    x            : (B, T, C) float32
    w_qkv        : (C, 3*head_size) bfloat16, from prepare_head_weights
    batch_blocks : grid steps over the batch. 1 = single fused step (best on
                   v5e/v6e); set 2 on v7x with larger B to map one big step
                   per TensorCore.
    returns      : (B, T, head_size) float32
    """
    B, T, C = x.shape
    assert B % batch_blocks == 0
    Bb = B // batch_blocks

    return pl.pallas_call(
        _head_kernel,
        out_shape=jax.ShapeDtypeStruct((B, T, head_size), jnp.float32),
        grid=(batch_blocks,),
        in_specs=[
            pl.BlockSpec((Bb, T, C), lambda b: (b, 0, 0)),
            # Constant block index -> fused weight slab fetched once, resident
            # in VMEM for every grid step.
            pl.BlockSpec((C, 3 * head_size), lambda b: (0, 0)),
        ],
        out_specs=pl.BlockSpec((Bb, T, head_size), lambda b: (b, 0, 0)),
        compiler_params=pltpu.CompilerParams(
            dimension_semantics=("parallel",)),
    )(x, w_qkv)


def _reference(x, wq, wk, wv):
    """Plain-JAX reference mirroring the PyTorch Head.forward (eval mode)."""
    B, T, C = x.shape
    hs = wq.shape[0]
    k = x @ wk.T
    q = x @ wq.T
    w = (q @ jnp.swapaxes(k, -1, -2)) * (hs ** -0.5)
    tril = jnp.tril(jnp.ones((T, T)))
    w = jnp.where(tril == 0, -jnp.inf, w)
    w = jax.nn.softmax(w, axis=-1)
    v = x @ wv.T
    return w @ v


if __name__ == "__main__":
    # Small shapes consistent with the module.
    B = 2
    block_size = 8          # T (sequence length == block_size)
    n_embed = 32            # C
    head_size = 8
    dropout = 0.0           # eval-mode dropout == identity

    key = jax.random.PRNGKey(0)
    kx, kq, kk, kv = jax.random.split(key, 4)

    x = jax.random.normal(kx, (B, block_size, n_embed), dtype=jnp.float32)
    wq = 0.02 * jax.random.normal(kq, (head_size, n_embed), jnp.float32)
    wk = 0.02 * jax.random.normal(kk, (head_size, n_embed), jnp.float32)
    wv = 0.02 * jax.random.normal(kv, (head_size, n_embed), jnp.float32)

    # One-time weight prep (parameter-load time, not per forward call).
    w_qkv = prepare_head_weights(wq, wk, wv)

    out = head_attention(x, w_qkv, head_size)
    out = jax.block_until_ready(out)

    ref = _reference(x, wq, wk, wv)
    assert out.shape == (B, block_size, head_size)
    # bf16 MXU inputs (f32 accumulation) + approx reciprocal -> slightly looser
    # tolerance vs. the exact-f32 reference.
    assert jnp.allclose(out, ref, atol=2e-2, rtol=2e-2), "mismatch vs reference"

    print("KERNEL_OK")
</pallas_src>

<mosaic_0001>
module attributes {stable_mosaic.version = 11 : i64} {
  func.func @_head_kernel(%arg0: i32, %arg1: memref<2x8x32xf32, #tpu.memory_space<vmem>>, %arg2: memref<32x24xbf16, #tpu.memory_space<vmem>>, %arg3: memref<2x8x8xf32, #tpu.memory_space<vmem>>) attributes {dimension_semantics = [#tpu.dimension_semantics<parallel>], iteration_bounds = array<i64: 1>, scalar_prefetch = 0 : i64, scratch_operands = 0 : i64, tpu.core_type = #tpu.core_type<tc>, window_params = [{transform_indices = @transform_0, window_bounds = array<i64: 2, 8, 32>}, {pipeline_mode = #tpu.pipeline_mode<synchronous>, transform_indices = @transform_1, window_bounds = array<i64: 32, 24>}, {transform_indices = @transform_2, window_bounds = array<i64: 2, 8, 8>}]} {
    %c0 = arith.constant 0 : index
    %c0_0 = arith.constant 0 : index
    %c0_1 = arith.constant 0 : index
    %0 = vector.load %arg1[%c0, %c0_0, %c0_1] : memref<2x8x32xf32, #tpu.memory_space<vmem>>, vector<2x8x32xf32>
    %1 = vector.shape_cast %0 : vector<2x8x32xf32> to vector<16x32xf32>
    %2 = arith.truncf %1 : vector<16x32xf32> to vector<16x32xbf16>
    %c0_2 = arith.constant 0 : index
    %c0_3 = arith.constant 0 : index
    %3 = vector.load %arg2[%c0_2, %c0_3] : memref<32x24xbf16, #tpu.memory_space<vmem>>, vector<32x24xbf16>
    %cst = arith.constant dense<0.000000e+00> : vector<16x24xf32>
    %4 = tpu.matmul %2, %3, %cst {dimension_numbers = #tpu.dot_dimension_numbers<[1], [0], [0], [1], [0, 0, 1, 1], [], []>} : vector<16x32xbf16>, vector<32x24xbf16>, vector<16x24xf32> -> vector<16x24xf32>
    %5 = vector.shape_cast %4 : vector<16x24xf32> to vector<2x8x24xf32>
    %6 = vector.extract_strided_slice %5 {offsets = [0, 0, 0], sizes = [2, 8, 8], strides = [1, 1, 1]} : vector<2x8x24xf32> to vector<2x8x8xf32>
    %7 = vector.extract_strided_slice %5 {offsets = [0, 0, 8], sizes = [2, 8, 8], strides = [1, 1, 1]} : vector<2x8x24xf32> to vector<2x8x8xf32>
    %8 = vector.extract_strided_slice %5 {offsets = [0, 0, 16], sizes = [2, 8, 8], strides = [1, 1, 1]} : vector<2x8x24xf32> to vector<2x8x8xf32>
    %9 = arith.truncf %6 : vector<2x8x8xf32> to vector<2x8x8xbf16>
    %10 = arith.truncf %7 : vector<2x8x8xf32> to vector<2x8x8xbf16>
    "tpu.trace_start"() <{level = 10 : i32, message = "bqd,bkd->bqk"}> : () -> ()
    %cst_4 = arith.constant dense<0.000000e+00> : vector<2x8x8xf32>
    %11 = tpu.matmul %9, %10, %cst_4 {dimension_numbers = #tpu.dot_dimension_numbers<[2], [2], [1], [1], [0, 0, 0, 1, 1, 1], [0], [0]>} : vector<2x8x8xbf16>, vector<2x8x8xbf16>, vector<2x8x8xf32> -> vector<2x8x8xf32>
    "tpu.trace_stop"() : () -> ()
    %cst_5 = arith.constant 0.353553385 : f32
    %12 = vector.broadcast %cst_5 : f32 to vector<2x8x8xf32>
    %13 = arith.mulf %11, %12 : vector<2x8x8xf32>
    %14 = tpu.iota {dimensions = array<i32: 0>} : vector<8x8xi32>
    %15 = tpu.iota {dimensions = array<i32: 1>} : vector<8x8xi32>
    %16 = arith.cmpi sle, %15, %14 : vector<8x8xi32>
    %17 = vector.shape_cast %16 : vector<8x8xi1> to vector<1x8x8xi1>
    %cst_6 = arith.constant 0xFF800000 : f32
    %18 = vector.shape_cast %17 : vector<1x8x8xi1> to vector<1x8x8xi1>
    %19 = vector.broadcast %18 : vector<1x8x8xi1> to vector<2x8x8xi1>
    %20 = vector.broadcast %cst_6 : f32 to vector<2x8x8xf32>
    %21 = arith.select %19, %13, %20 : vector<2x8x8xi1>, vector<2x8x8xf32>
    %cst_7 = arith.constant dense<0xFF800000> : vector<2x8xf32>
    %22 = vector.multi_reduction <maximumf>, %21, %cst_7 [2] : vector<2x8x8xf32> to vector<2x8xf32>
    %23 = vector.shape_cast %22 : vector<2x8xf32> to vector<2x8x1xf32>
    %24 = vector.broadcast %23 : vector<2x8x1xf32> to vector<2x8x8xf32>
    %25 = arith.subf %21, %24 : vector<2x8x8xf32>
    %26 = math.exp %25 : vector<2x8x8xf32>
    %cst_8 = arith.constant dense<0.000000e+00> : vector<2x8xf32>
    %27 = vector.multi_reduction <add>, %26, %cst_8 [2] : vector<2x8x8xf32> to vector<2x8xf32>
    %28 = vector.shape_cast %27 : vector<2x8xf32> to vector<2x8x1xf32>
    %29 = tpu.reciprocal %28 {approx = true} : vector<2x8x1xf32> -> vector<2x8x1xf32>
    %30 = vector.broadcast %29 : vector<2x8x1xf32> to vector<2x8x8xf32>
    %31 = arith.mulf %26, %30 : vector<2x8x8xf32>
    %32 = arith.truncf %31 : vector<2x8x8xf32> to vector<2x8x8xbf16>
    %33 = arith.truncf %8 : vector<2x8x8xf32> to vector<2x8x8xbf16>
    "tpu.trace_start"() <{level = 10 : i32, message = "bqk,bkd->bqd"}> : () -> ()
    %cst_9 = arith.constant dense<0.000000e+00> : vector<2x8x8xf32>
    %34 = tpu.matmul %32, %33, %cst_9 {dimension_numbers = #tpu.dot_dimension_numbers<[2], [1], [1], [2], [0, 0, 0, 1, 1, 2], [0], [0]>} : vector<2x8x8xbf16>, vector<2x8x8xbf16>, vector<2x8x8xf32> -> vector<2x8x8xf32>
    "tpu.trace_stop"() : () -> ()
    %c0_10 = arith.constant 0 : index
    %c0_11 = arith.constant 0 : index
    %c0_12 = arith.constant 0 : index
    %35 = vector.load %arg3[%c0_10, %c0_11, %c0_12] : memref<2x8x8xf32, #tpu.memory_space<vmem>>, vector<2x8x8xf32>
    tpu.vector_store %arg3[%c0_10, %c0_11, %c0_12], %34 {strides = array<i32>} : memref<2x8x8xf32, #tpu.memory_space<vmem>>, vector<2x8x8xf32>,
    return
  }
  func.func @transform_0(%arg0: i32) -> (i32, i32, i32) {
    %c0_i32 = arith.constant 0 : i32
    %c0_i32_0 = arith.constant 0 : i32
    %c0_i32_1 = arith.constant 0 : i32
    return %arg0, %c0_i32, %c0_i32_0 : i32, i32, i32
  }
  func.func @transform_1(%arg0: i32) -> (i32, i32) {
    %c0_i32 = arith.constant 0 : i32
    %c0_i32_0 = arith.constant 0 : i32
    %c0_i32_1 = arith.constant 0 : i32
    return %c0_i32, %c0_i32_0 : i32, i32
  }
  func.func @transform_2(%arg0: i32) -> (i32, i32, i32) {
    %c0_i32 = arith.constant 0 : i32
    %c0_i32_0 = arith.constant 0 : i32
    %c0_i32_1 = arith.constant 0 : i32
    return %arg0, %c0_i32, %c0_i32_0 : i32, i32, i32
  }
}

</mosaic_0001>

<llo_original>
// kernel: tpu_custom_call.1
$region0: #{tpu_custom_call.1}
  #allocation0 [shape = 'u32[]', space=smem, size = 0x4, offset = 0x4, fixed_abs, tag = 'smem constant byte address 0x4 - core index']
  #allocation1 [shape = 'u32[72,128]{1,0:T(1,128)}', space=vmem, size = 0x9000, scoped, tag = 'internal scratch']
  %s0 = inlined_call_operand.vmem [shape: f32[2,8,32], index: 0, kind: input, shape index: {}]
  %s1 = inlined_call_operand.vmem [shape: bf16[32,24], index: 1, kind: input, shape index: {}]
  %s2 = inlined_call_operand.hbm [shape: f32[2,8,8], index: 2, kind: output, shape index: {}]
  %s3 = sld [smem:[#allocation0]]
  $region18: #{tpu_custom_call.1} parent=0
    _
  %s5 = ssub.s32 1, %s3
  %s6 = scalar_select 0, %s5, %s3
  $region1: #{tpu_custom_call.1} parent=0
    #allocation2 [shape = 'u8[8192]{0}', space=vmem, size = 0x2000, scoped, tag = 'output window, operand 0, single buffered']
    #allocation3 [shape = 's32[1]{0}', space=sflag, size = 0x4, scoped, tag = 'scoped memory for tpu_custom_call.1']
    %7 = vsyncpa [#allocation3], 0
    // Predicated region
    $region2: #{tpu_custom_call.1} parent=1 // pred_check
      _
    $region3: #{tpu_custom_call.1} parent=1 // pred_check_branch
      %9 = sbr.rel (0) target = $region5
    $region4: #{tpu_custom_call.1} parent=1 // pred_region
      _
    $region5: #{tpu_custom_call.1} parent=1 // pred_fallthru
      _
    // Predicated region
    $region6: #{tpu_custom_call.1} parent=1 // pred_check
      _
    $region7: #{tpu_custom_call.1} parent=1 // pred_check_branch
      %11 = sbr.rel (0) target = $region9
    $region8: #{tpu_custom_call.1} parent=1 // pred_region
      _
    $region9: #{tpu_custom_call.1} parent=1 // pred_fallthru
      _
    %v13 = vld [vmem:[%s0] sm:$0xff]
    %v14 = vld [vmem:[%s0 + $0x8] sm:$0xff]
    %v15 = vpack.c.bf16 %v14, %v13
    %v16 = vld [vmem:[%s1] sm:$0xf]
    %v17 = vld [vmem:[%s1 + $0x4] sm:$0xf]
    %v18 = vld [vmem:[%s1 + $0x8] sm:$0xf]
    %v19 = vld [vmem:[%s1 + $0xc] sm:$0xf]
    %v24 = vunpack.c.l.b16 %v16
    %v25 = vunpack.c.l.b16 %v17
    %v26 = vunpack.c.l.b16 %v18
    %v27 = vunpack.c.l.b16 %v19
    %v28 = vpack.c.b16 %v25, %v24
    %v29 = vpack.c.b16 %v27, %v26
    %vm32 = vcmask 261120
    %v34 = vsel %vm32, %v15, 0
    %36 = vmatpush.bf16.msra.mxu0 0
    %37 = vmatpush.bf16.msra.mxu0 0
    %38 = vmatpush.bf16.msra.mxu0 0
    %39 = vmatpush.bf16.msra.mxu0 0
    %40 = vmatpush.bf16.msra.mxu0 0
    %41 = vmatpush.bf16.msra.mxu0 0
    %42 = vmatpush.bf16.msra.mxu0 %v29
    %43 = vmatpush.bf16.msra.mxu0 %v28
    %44 = vmatmul.bf16.gmra.mxu0 %v34
    %v45 = vpop.f32.mrf.mxu0
    %v46 = vadd.f32 0.0, %v45
    %v47 = vpop.f32.mrf.mxu0
    %v48 = vadd.f32 0.0, %v47
    %49 = vdwg.mxu0
    %v50 = vpack.c.bf16 %v46, %v46
    %v51 = vpack.c.bf16 %v48, %v48
    %v53 = vunpack.c.l.b16 %v50
    %v54 = vpack.c.b16 %v53, %v53
    %55 = vrot.lane.b32.xlu0 %v54, 120
    %v56 = vpop.permute.xlu0 %55
    %vm57 = vcmask 64512
    %v59 = vsel %vm57, %v50, 0
    %v62 = vsel %vm57, %v56, 0
    %64 = vmatpush.bf16.xpose.msra.mxu0 0
    %65 = vmatpush.bf16.xpose.msra.mxu0 0
    %66 = vmatpush.bf16.xpose.msra.mxu0 0
    %67 = vmatpush.bf16.xpose.msra.mxu0 0
    %68 = vmatpush.bf16.xpose.msra.mxu0 0
    %69 = vmatpush.bf16.xpose.msra.mxu0 0
    %70 = vmatpush.bf16.xpose.msra.mxu0 0
    %71 = vmatpush.bf16.xpose.msra.mxu0 %v62
    %72 = vmatmul.bf16.gmra.mxu0 %v59
    %v73 = vpop.f32.mrf.mxu0
    %v74 = vadd.f32 0.0, %v73
    %v75 = vpop.f32.mrf.mxu0
    %76 = vdwg.mxu0
    %v78 = vunpack.c.l.b16 %v51
    %v79 = vpack.c.b16 %v78, %v78
    %80 = vrot.lane.b32.xlu0 %v79, 120
    %v81 = vpop.permute.xlu0 %80
    %v83 = vsel %vm57, %v51, 0
    %v86 = vsel %vm57, %v81, 0
    %88 = vmatpush.bf16.xpose.msra.mxu0 0
    %89 = vmatpush.bf16.xpose.msra.mxu0 0
    %90 = vmatpush.bf16.xpose.msra.mxu0 0
    %91 = vmatpush.bf16.xpose.msra.mxu0 0
    %92 = vmatpush.bf16.xpose.msra.mxu0 0
    %93 = vmatpush.bf16.xpose.msra.mxu0 0
    %94 = vmatpush.bf16.xpose.msra.mxu0 0
    %95 = vmatpush.bf16.xpose.msra.mxu0 %v86
    %96 = vmatmul.bf16.gmra.mxu0 %v83
    %v97 = vpop.f32.mrf.mxu0
    %v98 = vadd.f32 0.0, %v97
    %v99 = vpop.f32.mrf.mxu0
    %100 = vdwg.mxu0
    %v101 = vmul.f32 %v74, 0.35355338
    %v102 = vmul.f32 %v98, 0.35355338
    %v103 = vlaneseq
    %v104 = vshrl.u32 %v103, 7
    %v105 = vlaneseq
    %v106 = vand.u32 %v105, 127
    %vm107 = vcmp.le.s32.totalorder %v106, %v104
    %v108 = vsel %vm107, 1, 0
    %vm109 = vcmp.eq.s32.totalorder %v108, 1
    %v110 = vsel %vm109, %v101, -inf
    %v111 = vsel %vm109, %v102, -inf
    %v112 = vsel %vm57, %v110, -inf
    %113 = vmax.xlane.f32.xlu0 %v112
    %v114 = vpop.xlane.xlu0 %113
    %v115 = vsel %vm57, %v111, -inf
    %116 = vmax.xlane.f32.xlu0 %v115
    %v117 = vpop.xlane.xlu0 %116
    %v118 = vsub.f32 %v110, %v114
    %v119 = vsub.f32 %v111, %v117
    %v120 = vmul.f32 %v118, 1.442695
    %v121 = vpow.pop %v120
    %v122 = vmul.f32 %v119, 1.442695
    %v123 = vpow.pop %v122
    %v124 = vsel %vm57, %v121, 0.0
    %125 = vadd.xlane.f32.xlu0 %v124
    %v126 = vpop.xlane.xlu0 %125
    %v127 = vsel %vm57, %v123, 0.0
    %128 = vadd.xlane.f32.xlu0 %v127
    %v129 = vpop.xlane.xlu0 %128
    %v130 = vrcp.pop %v126
    %v131 = vrcp.pop %v129
    %v132 = vmul.f32 %v121, %v130
    %v133 = vmul.f32 %v123, %v131
    %v134 = vpack.c.bf16 %v132, %v132
    %v135 = vpack.c.bf16 %v133, %v133
    %136 = vrot.lane.b32.xlu0 %v54, 112
    %v137 = vpop.permute.xlu0 %136
    %v139 = vsel %vm57, %v134, 0
    %vm141 = vcmask 1043456
    %v143 = vsel %vm141, %v137, 0
    %145 = vmatpush.bf16.msra.mxu0 0
    %146 = vmatpush.bf16.msra.mxu0 0
    %147 = vmatpush.bf16.msra.mxu0 0
    %148 = vmatpush.bf16.msra.mxu0 0
    %149 = vmatpush.bf16.msra.mxu0 0
    %150 = vmatpush.bf16.msra.mxu0 0
    %151 = vmatpush.bf16.msra.mxu0 0
    %152 = vmatpush.bf16.msra.mxu0 %v143
    %153 = vmatmul.bf16.gmra.mxu0 %v139
    %v154 = vpop.f32.mrf.mxu0
    %v155 = vadd.f32 0.0, %v154
    %v156 = vpop.f32.mrf.mxu0
    %157 = vdwg.mxu0
    %158 = vrot.lane.b32.xlu0 %v79, 112
    %v159 = vpop.permute.xlu0 %158
    %v161 = vsel %vm57, %v135, 0
    %v164 = vsel %vm141, %v159, 0
    %166 = vmatpush.bf16.msra.mxu0 0
    %167 = vmatpush.bf16.msra.mxu0 0
    %168 = vmatpush.bf16.msra.mxu0 0
    %169 = vmatpush.bf16.msra.mxu0 0
    %170 = vmatpush.bf16.msra.mxu0 0
    %171 = vmatpush.bf16.msra.mxu0 0
    %172 = vmatpush.bf16.msra.mxu0 0
    %173 = vmatpush.bf16.msra.mxu0 %v164
    %174 = vmatmul.bf16.gmra.mxu0 %v161
    %v175 = vpop.f32.mrf.mxu0
    %v176 = vadd.f32 0.0, %v175
    %v177 = vpop.f32.mrf.mxu0
    %178 = vdwg.mxu0
    %179 = vst.msk [vmem:[#allocation2] sm:$0xff] %vm57, %v155
    %180 = vst.msk [vmem:[#allocation2 + $0x8] sm:$0xff] %vm57, %v176
    // Predicated region
    $region10: #{tpu_custom_call.1} parent=1 // pred_check
      _
    $region11: #{tpu_custom_call.1} parent=1 // pred_check_branch
      %182 = sbr.rel (0) target = $region13
    $region12: #{tpu_custom_call.1} parent=1 // pred_region
      %184 = vsyncadd [#allocation3], 0
      %s185 = sshll.u32 [#allocation2], 4
      %s186 = int_to_ptr.vmem [resolvable:$true] %s185
      %s187 = sshll.u32 %s2, 4
      %s188 = int_to_ptr.hbm [resolvable:$true] %s187
      %193 = dma.vmem_to_hbm [thread:$0]  %s186, 256, %s188, [#allocation3], 128, 128, 8
    $region13: #{tpu_custom_call.1} parent=1 // pred_fallthru
      _
    // Predicated region
    $region14: #{tpu_custom_call.1} parent=1 // pred_check
      _
    $region15: #{tpu_custom_call.1} parent=1 // pred_check_branch
      %195 = sbr.rel (0) target = $region17
    $region16: #{tpu_custom_call.1} parent=1 // pred_region
      %197 = dma.done [#allocation3], 256
    $region17: #{tpu_custom_call.1} parent=1 // pred_fallthru
      _
    %198 = vsyncpa [#allocation3], 1

</llo_original>
